<compile_context>
chip_gen: v7x
topology: tpu7x:2x2x1
jax: 0.10.0
libtpu: 0.0.40
codegen_flags: <defaults>
</compile_context>

<pallas_src>
import functools
import math

import jax
import jax.numpy as jnp
from jax.experimental import pallas as pl
from jax.experimental.pallas import tpu as pltpu


_INV_SQRT2 = 1.0 / math.sqrt(2.0)


def _round_up(a, b):
    return (a + b - 1) // b * b


def _cdiv(a, b):
    return (a + b - 1) // b


def _gelu_exact(x):
    # erf-based GELU (matches torch.nn.GELU() default); computed in f32.
    return 0.5 * x * (1.0 + jax.lax.erf(x * _INV_SQRT2))


def _apply_activation(h, activation, approx_gelu):
    if activation == "relu":
        return jnp.maximum(h, 0.0)
    if approx_gelu:
        # tanh-based GELU: transcendental goes to the EUP slot (free under MXU).
        return jax.nn.gelu(h, approximate=True)
    return _gelu_exact(h)


# --------------------------------------------------------------------------- #
# Kernels
# --------------------------------------------------------------------------- #
def ffn_resident_kernel(x_ref, w1_ref, b1_ref, w2_ref, b2_ref, o_ref, *,
                        activation, approx_gelu):
    # Whole W1/W2 resident in VMEM; one token tile per grid step, no reduction.
    h = jnp.dot(x_ref[...], w1_ref[...], preferred_element_type=jnp.float32)
    h = _apply_activation(h + b1_ref[...], activation, approx_gelu)
    out = jnp.dot(h.astype(w2_ref.dtype), w2_ref[...],
                  preferred_element_type=jnp.float32)
    o_ref[...] = (out + b2_ref[...]).astype(o_ref.dtype)


def ffn_tiled_kernel(x_ref, w1_ref, b1_ref, w2_ref, b2_ref, o_ref, acc_ref, *,
                     activation, approx_gelu):
    f = pl.program_id(1)

    @pl.when(f == 0)
    def _():
        acc_ref[...] = jnp.zeros_like(acc_ref)

    # fc1 partial for this F tile: (tm, E) @ (E, tf) -> (tm, tf) in f32.
    h = jnp.dot(x_ref[...], w1_ref[...], preferred_element_type=jnp.float32)
    h = _apply_activation(h + b1_ref[...], activation, approx_gelu)

    # fc2 partial: (tm, tf) @ (tf, E) accumulated in f32 scratch.
    acc_ref[...] += jnp.dot(h.astype(w2_ref.dtype), w2_ref[...],
                            preferred_element_type=jnp.float32)

    @pl.when(f == pl.num_programs(1) - 1)
    def _():
        # b2 added exactly once, in the reduction epilogue.
        o_ref[...] = (acc_ref[...] + b2_ref[...]).astype(o_ref.dtype)


# --------------------------------------------------------------------------- #
# Plan selection (generation-aware VMEM budgeting)
# --------------------------------------------------------------------------- #
def _vmem_capacity_bytes():
    try:
        info = pltpu.get_tpu_info()
        cap = getattr(info, "vmem_capacity_bytes", None)
        if cap:
            return int(cap)
    except Exception:
        pass
    return 64 * 1024 * 1024  # conservative: v7x per-TC capacity


def _vmem_resident(tm, E_pad, F_pad, isz, osz):
    return (2 * tm * E_pad * isz              # x (double-buffered)
            + 2 * tm * E_pad * osz            # out (double-buffered)
            + 2 * E_pad * F_pad * isz         # W1 (conservatively 2 buffers)
            + 2 * F_pad * E_pad * isz         # W2
            + 2 * (F_pad + E_pad) * 4         # biases (f32)
            + 2 * tm * F_pad * 4)             # f32 activation intermediates


def _vmem_tiled(tm, tf, E_pad, isz, osz):
    return (2 * tm * E_pad * isz              # x
            + 2 * tm * E_pad * osz            # out
            + 2 * E_pad * tf * isz            # W1 F-slice
            + 2 * tf * E_pad * isz            # W2 F-slice
            + 2 * (tf + E_pad) * 4            # bias slices
            + tm * E_pad * 4                  # f32 accumulator scratch
            + 2 * tm * tf * 4)                # f32 activation intermediates


def _token_tile_candidates(T):
    if T <= 512:
        return [_round_up(max(T, 1), 16)]
    cands = [512, 384, 256, 192, 128]
    # minimize padded rows first; tie-break toward bigger tiles (fewer
    # weight re-streams / grid steps).
    cands.sort(key=lambda tm: (_round_up(T, tm) - T, -tm))
    return cands


def _select_plan(T, E_pad, F_pad128, isz, osz, vmem_budget):
    tm_cands = _token_tile_candidates(T)

    # 1) weights-resident fast path: W1/W2 stay in VMEM, weights read once.
    for tm in tm_cands:
        if _vmem_resident(tm, E_pad, F_pad128, isz, osz) <= vmem_budget:
            return "resident", tm, F_pad128, F_pad128

    # 2) F-tiled reduction path: stream balanced 128-aligned weight slices.
    for tm in tm_cands:
        tf_targets = []
        for t in (min(F_pad128, 4096), 2048, 1024, 512, 256, 128):
            if t <= F_pad128 and t not in tf_targets:
                tf_targets.append(t)
        for tf_target in tf_targets:
            n = _cdiv(F_pad128, tf_target)
            tf = _round_up(_cdiv(F_pad128, n), 128)
            if _vmem_tiled(tm, tf, E_pad, isz, osz) <= vmem_budget:
                return "tiled", tm, tf, n * tf

    # 3) last resort (enormous E): smallest tiles; stays correct.
    tm = 16 if T <= 512 else 128
    return "tiled", tm, 128, F_pad128


# --------------------------------------------------------------------------- #
# Wrapper
# --------------------------------------------------------------------------- #
def feedforward_pallas(x, w1, b1, w2, b2, *, activation="gelu",
                       gelu_approximate=True, compute_dtype=jnp.bfloat16):
    """x: (..., E). Weights stored transposed: w1 (E, F), w2 (F, E).
    Returns same shape / dtype as x."""
    assert activation in ("gelu", "relu")
    orig_shape = x.shape
    out_dtype = x.dtype
    E = orig_shape[-1]
    F = w1.shape[1]
    assert w1.shape == (E, F) and w2.shape == (F, E)
    assert b1.shape == (F,) and b2.shape == (E,)

    x2d = x.reshape(-1, E)
    T = x2d.shape[0]

    isz = jnp.dtype(compute_dtype).itemsize
    osz = jnp.dtype(out_dtype).itemsize

    E_pad = _round_up(E, 128)        # lane-dense output/accumulator
    F_pad128 = _round_up(F, 128)

    vmem_cap = _vmem_capacity_bytes()
    # ~51 MiB on v7x (64 MiB/TC), ~102 MiB on v5e/v6e (128 MiB).
    vmem_budget = int(vmem_cap * 0.80)

    mode, tm, tf, F_pad = _select_plan(T, E_pad, F_pad128, isz, osz, vmem_budget)
    T_pad = _round_up(T, tm)

    # ---- cast + zero-pad (padding is semantically neutral). ----
    xc = x2d if x2d.dtype == compute_dtype else x2d.astype(compute_dtype)
    w1c = w1 if w1.dtype == compute_dtype else w1.astype(compute_dtype)
    w2c = w2 if w2.dtype == compute_dtype else w2.astype(compute_dtype)
    b1f = b1.astype(jnp.float32)
    b2f = b2.astype(jnp.float32)
    if T_pad != T or E_pad != E:
        xc = jnp.pad(xc, ((0, T_pad - T), (0, E_pad - E)))
    if E_pad != E or F_pad != F:
        w1c = jnp.pad(w1c, ((0, E_pad - E), (0, F_pad - F)))
        w2c = jnp.pad(w2c, ((0, F_pad - F), (0, E_pad - E)))
        b1f = jnp.pad(b1f, ((0, F_pad - F),))
        b2f = jnp.pad(b2f, ((0, E_pad - E),))
    b1_2d = b1f.reshape(1, F_pad)
    b2_2d = b2f.reshape(1, E_pad)

    n_tok = T_pad // tm

    if mode == "resident":
        grid = (n_tok,)
        in_specs = [
            pl.BlockSpec((tm, E_pad), lambda i: (i, 0)),        # x token tile
            pl.BlockSpec((E_pad, F_pad), lambda i: (0, 0)),     # W1 (resident)
            pl.BlockSpec((1, F_pad), lambda i: (0, 0)),         # b1 (resident)
            pl.BlockSpec((F_pad, E_pad), lambda i: (0, 0)),     # W2 (resident)
            pl.BlockSpec((1, E_pad), lambda i: (0, 0)),         # b2 (resident)
        ]
        out_specs = pl.BlockSpec((tm, E_pad), lambda i: (i, 0))
        scratch_shapes = []
        dims = ("parallel",)
        kernel = functools.partial(ffn_resident_kernel, activation=activation,
                                   approx_gelu=gelu_approximate)
        weight_streams = 1                       # weights DMA'd from HBM once
    else:
        grid = (n_tok, F_pad // tf)
        in_specs = [
            pl.BlockSpec((tm, E_pad), lambda i, f: (i, 0)),     # x token tile
            pl.BlockSpec((E_pad, tf), lambda i, f: (0, f)),     # W1 F-slice
            pl.BlockSpec((1, tf), lambda i, f: (0, f)),         # b1 F-slice
            pl.BlockSpec((tf, E_pad), lambda i, f: (f, 0)),     # W2 F-slice
            pl.BlockSpec((1, E_pad), lambda i, f: (0, 0)),      # b2 (constant)
        ]
        out_specs = pl.BlockSpec((tm, E_pad), lambda i, f: (i, 0))
        scratch_shapes = [pltpu.VMEM((tm, E_pad), jnp.float32)]
        dims = ("parallel", "arbitrary")
        kernel = functools.partial(ffn_tiled_kernel, activation=activation,
                                   approx_gelu=gelu_approximate)
        weight_streams = n_tok                   # W1/W2 re-streamed per token tile

    weight_bytes = 2 * E_pad * F_pad * isz       # W1 + W2
    cost = pl.CostEstimate(
        flops=4 * T_pad * E_pad * F_pad,                        # two matmuls
        transcendentals=(T_pad * F_pad if activation == "gelu" else 0),
        bytes_accessed=(T_pad * E_pad * isz                     # x
                        + weight_streams * weight_bytes         # streamed weights
                        + (F_pad + E_pad) * 4                   # biases
                        + T_pad * E_pad * osz),                 # out
    )

    out = pl.pallas_call(
        kernel,
        out_shape=jax.ShapeDtypeStruct((T_pad, E_pad), out_dtype),
        grid_spec=pltpu.PrefetchScalarGridSpec(
            num_scalar_prefetch=0,
            grid=grid,
            in_specs=in_specs,
            out_specs=out_specs,
            scratch_shapes=scratch_shapes,
        ),
        compiler_params=pltpu.CompilerParams(
            dimension_semantics=dims,
            vmem_limit_bytes=vmem_budget,
        ),
        cost_estimate=cost,
    )(xc, w1c, b1_2d, w2c, b2_2d)

    if T_pad != T or E_pad != E:
        out = out[:T, :E]
    return out.reshape(orig_shape)


# --------------------------------------------------------------------------- #
# Param init (mimics nn.Linear default: uniform +/- 1/sqrt(fan_in))
# --------------------------------------------------------------------------- #
def init_params(key, embedding_dim, ffn_embedding_dim, dtype=jnp.float32):
    """Weights stored transposed: (in_features, out_features)."""
    k1, k2, k3, k4 = jax.random.split(key, 4)
    bound1 = 1.0 / jnp.sqrt(embedding_dim)
    bound2 = 1.0 / jnp.sqrt(ffn_embedding_dim)
    w1 = jax.random.uniform(k1, (embedding_dim, ffn_embedding_dim),
                            dtype, -bound1, bound1)
    b1 = jax.random.uniform(k2, (ffn_embedding_dim,), dtype, -bound1, bound1)
    w2 = jax.random.uniform(k3, (ffn_embedding_dim, embedding_dim),
                            dtype, -bound2, bound2)
    b2 = jax.random.uniform(k4, (embedding_dim,), dtype, -bound2, bound2)
    return w1, b1, w2, b2


if __name__ == "__main__":
    # Small shapes: seq=8, batch=2, embedding_dim=32, ffn_embedding_dim=64
    seq, batch, E, F = 8, 2, 32, 64
    key = jax.random.PRNGKey(0)
    kx, kp = jax.random.split(key)

    x = jax.random.normal(kx, (seq, batch, E), jnp.float32)
    w1, b1, w2, b2 = init_params(kp, E, F)

    # pure-JAX f32 reference (exact erf GELU, like torch.nn.GELU()).
    ref_gelu = _gelu_exact(x @ w1 + b1) @ w2 + b2
    ref_relu = jnp.maximum(x @ w1 + b1, 0.0) @ w2 + b2

    # Default fast path: bf16 MXU matmuls, f32 accumulation, tanh GELU.
    out = feedforward_pallas(x, w1, b1, w2, b2, activation="gelu")
    out = jax.block_until_ready(out)
    assert out.shape == x.shape
    assert out.dtype == x.dtype
    assert jnp.allclose(out, ref_gelu, atol=2e-2, rtol=2e-2), "bf16 path mismatch"

    # Full-precision + exact-erf path (tight tolerance vs reference).
    out_f32 = feedforward_pallas(x, w1, b1, w2, b2, activation="gelu",
                                 gelu_approximate=False,
                                 compute_dtype=jnp.float32)
    out_f32 = jax.block_until_ready(out_f32)
    assert jnp.allclose(out_f32, ref_gelu, atol=1e-5, rtol=1e-5), "f32 path mismatch"

    # ReLU path sanity check.
    out_relu = feedforward_pallas(x, w1, b1, w2, b2, activation="relu",
                                  compute_dtype=jnp.float32)
    out_relu = jax.block_until_ready(out_relu)
    assert jnp.allclose(out_relu, ref_relu, atol=1e-5, rtol=1e-5), "relu path mismatch"

    print("KERNEL_OK")
</pallas_src>

<mosaic_0001>
module attributes {stable_mosaic.version = 11 : i64} {
  func.func @ffn_resident_kernel(%arg0: i32, %arg1: memref<16x128xbf16, #tpu.memory_space<vmem>>, %arg2: memref<128x128xbf16, #tpu.memory_space<vmem>>, %arg3: memref<1x128xf32, #tpu.memory_space<vmem>>, %arg4: memref<128x128xbf16, #tpu.memory_space<vmem>>, %arg5: memref<1x128xf32, #tpu.memory_space<vmem>>, %arg6: memref<16x128xf32, #tpu.memory_space<vmem>>) attributes {dimension_semantics = [#tpu.dimension_semantics<parallel>], iteration_bounds = array<i64: 1>, scalar_prefetch = 0 : i64, scratch_operands = 0 : i64, tpu.core_type = #tpu.core_type<tc>, window_params = [{transform_indices = @transform_0, window_bounds = array<i64: 16, 128>}, {pipeline_mode = #tpu.pipeline_mode<synchronous>, transform_indices = @transform_1, window_bounds = array<i64: 128, 128>}, {pipeline_mode = #tpu.pipeline_mode<synchronous>, transform_indices = @transform_2, window_bounds = array<i64: 1, 128>}, {pipeline_mode = #tpu.pipeline_mode<synchronous>, transform_indices = @transform_3, window_bounds = array<i64: 128, 128>}, {pipeline_mode = #tpu.pipeline_mode<synchronous>, transform_indices = @transform_4, window_bounds = array<i64: 1, 128>}, {transform_indices = @transform_5, window_bounds = array<i64: 16, 128>}]} {
    %c0 = arith.constant 0 : index
    %c0_0 = arith.constant 0 : index
    %0 = vector.load %arg1[%c0, %c0_0] : memref<16x128xbf16, #tpu.memory_space<vmem>>, vector<16x128xbf16>
    %c0_1 = arith.constant 0 : index
    %c0_2 = arith.constant 0 : index
    %1 = vector.load %arg2[%c0_1, %c0_2] : memref<128x128xbf16, #tpu.memory_space<vmem>>, vector<128x128xbf16>
    %cst = arith.constant dense<0.000000e+00> : vector<16x128xf32>
    %2 = tpu.matmul %0, %1, %cst {dimension_numbers = #tpu.dot_dimension_numbers<[1], [0], [0], [1], [0, 0, 1, 1], [], []>} : vector<16x128xbf16>, vector<128x128xbf16>, vector<16x128xf32> -> vector<16x128xf32>
    %c0_3 = arith.constant 0 : index
    %c0_4 = arith.constant 0 : index
    %3 = vector.load %arg3[%c0_3, %c0_4] : memref<1x128xf32, #tpu.memory_space<vmem>>, vector<1x128xf32>
    %4 = vector.broadcast %3 : vector<1x128xf32> to vector<16x128xf32>
    %5 = arith.addf %2, %4 : vector<16x128xf32>
    %6 = arith.mulf %5, %5 : vector<16x128xf32>
    %7 = arith.mulf %5, %6 : vector<16x128xf32>
    %cst_5 = arith.constant 4.471500e-02 : f32
    %8 = vector.broadcast %cst_5 : f32 to vector<16x128xf32>
    %9 = arith.mulf %8, %7 : vector<16x128xf32>
    %10 = arith.addf %5, %9 : vector<16x128xf32>
    %cst_6 = arith.constant 0.797884583 : f32
    %11 = vector.broadcast %cst_6 : f32 to vector<16x128xf32>
    %12 = arith.mulf %11, %10 : vector<16x128xf32>
    %13 = math.tanh %12 : vector<16x128xf32>
    %cst_7 = arith.constant 1.000000e+00 : f32
    %14 = vector.broadcast %cst_7 : f32 to vector<16x128xf32>
    %15 = arith.addf %14, %13 : vector<16x128xf32>
    %cst_8 = arith.constant 5.000000e-01 : f32
    %16 = vector.broadcast %cst_8 : f32 to vector<16x128xf32>
    %17 = arith.mulf %16, %15 : vector<16x128xf32>
    %18 = arith.mulf %5, %17 : vector<16x128xf32>
    %19 = arith.truncf %18 : vector<16x128xf32> to vector<16x128xbf16>
    %c0_9 = arith.constant 0 : index
    %c0_10 = arith.constant 0 : index
    %20 = vector.load %arg4[%c0_9, %c0_10] : memref<128x128xbf16, #tpu.memory_space<vmem>>, vector<128x128xbf16>
    %cst_11 = arith.constant dense<0.000000e+00> : vector<16x128xf32>
    %21 = tpu.matmul %19, %20, %cst_11 {dimension_numbers = #tpu.dot_dimension_numbers<[1], [0], [0], [1], [0, 0, 1, 1], [], []>} : vector<16x128xbf16>, vector<128x128xbf16>, vector<16x128xf32> -> vector<16x128xf32>
    %c0_12 = arith.constant 0 : index
    %c0_13 = arith.constant 0 : index
    %22 = vector.load %arg5[%c0_12, %c0_13] : memref<1x128xf32, #tpu.memory_space<vmem>>, vector<1x128xf32>
    %23 = vector.broadcast %22 : vector<1x128xf32> to vector<16x128xf32>
    %24 = arith.addf %21, %23 : vector<16x128xf32>
    %c0_14 = arith.constant 0 : index
    %c0_15 = arith.constant 0 : index
    %25 = vector.load %arg6[%c0_14, %c0_15] : memref<16x128xf32, #tpu.memory_space<vmem>>, vector<16x128xf32>
    tpu.vector_store %arg6[%c0_14, %c0_15], %24 {strides = array<i32>} : memref<16x128xf32, #tpu.memory_space<vmem>>, vector<16x128xf32>,
    return
  }
  func.func @transform_0(%arg0: i32) -> (i32, i32) {
    %c0_i32 = arith.constant 0 : i32
    %c0_i32_0 = arith.constant 0 : i32
    return %arg0, %c0_i32 : i32, i32
  }
  func.func @transform_1(%arg0: i32) -> (i32, i32) {
    %c0_i32 = arith.constant 0 : i32
    %c0_i32_0 = arith.constant 0 : i32
    %c0_i32_1 = arith.constant 0 : i32
    return %c0_i32, %c0_i32_0 : i32, i32
  }
  func.func @transform_2(%arg0: i32) -> (i32, i32) {
    %c0_i32 = arith.constant 0 : i32
    %c0_i32_0 = arith.constant 0 : i32
    %c0_i32_1 = arith.constant 0 : i32
    return %c0_i32, %c0_i32_0 : i32, i32
  }
  func.func @transform_3(%arg0: i32) -> (i32, i32) {
    %c0_i32 = arith.constant 0 : i32
    %c0_i32_0 = arith.constant 0 : i32
    %c0_i32_1 = arith.constant 0 : i32
    return %c0_i32, %c0_i32_0 : i32, i32
  }
  func.func @transform_4(%arg0: i32) -> (i32, i32) {
    %c0_i32 = arith.constant 0 : i32
    %c0_i32_0 = arith.constant 0 : i32
    %c0_i32_1 = arith.constant 0 : i32
    return %c0_i32, %c0_i32_0 : i32, i32
  }
  func.func @transform_5(%arg0: i32) -> (i32, i32) {
    %c0_i32 = arith.constant 0 : i32
    %c0_i32_0 = arith.constant 0 : i32
    return %arg0, %c0_i32 : i32, i32
  }
}

</mosaic_0001>

<llo_original>
// kernel: tpu_custom_call.1
$region0: #{tpu_custom_call.1}
  #allocation0 [shape = 'u32[]', space=smem, size = 0x4, offset = 0x4, fixed_abs, tag = 'smem constant byte address 0x4 - core index']
  #allocation1 [shape = 'u32[144,128]{1,0:T(1,128)}', space=vmem, size = 0x12000, scoped, tag = 'internal scratch']
  %s0 = inlined_call_operand.hbm [shape: bf16[16,128], index: 0, kind: input, shape index: {}]
  %s1 = inlined_call_operand.hbm [shape: bf16[128,128], index: 1, kind: input, shape index: {}]
  %s2 = inlined_call_operand.vmem [shape: f32[1,128], index: 2, kind: input, shape index: {}]
  %s3 = inlined_call_operand.hbm [shape: bf16[128,128], index: 3, kind: input, shape index: {}]
  %s4 = inlined_call_operand.vmem [shape: f32[1,128], index: 4, kind: input, shape index: {}]
  %s5 = inlined_call_operand.hbm [shape: f32[16,128], index: 5, kind: output, shape index: {}]
  %s6 = sld [smem:[#allocation0]]
  $region42: #{tpu_custom_call.1} parent=0
    _
  %s8 = ssub.s32 1, %s6
  %s9 = scalar_select 0, %s8, %s6
  $region1: #{tpu_custom_call.1} parent=0
    #allocation2 [shape = 'u8[4096]{0}', space=vmem, size = 0x1000, scoped, tag = 'input window, operand 0, single buffered']
    #allocation3 [shape = 's32[1]{0}', space=sflag, size = 0x4, scoped, tag = 'scoped memory for tpu_custom_call.1']
    #allocation4 [shape = 's32[1]{0}', space=sflag, size = 0x4, scoped, tag = 'scoped memory for tpu_custom_call.1']
    #allocation5 [shape = 'u8[32768]{0}', space=vmem, size = 0x8000, scoped, tag = 'input window, operand 1, single buffered']
    #allocation6 [shape = 's32[1]{0}', space=sflag, size = 0x4, scoped, tag = 'scoped memory for tpu_custom_call.1']
    #allocation7 [shape = 'u8[32768]{0}', space=vmem, size = 0x8000, scoped, tag = 'input window, operand 3, single buffered']
    #allocation8 [shape = 'u8[8192]{0}', space=vmem, size = 0x2000, scoped, tag = 'output window, operand 0, single buffered']
    %10 = vsyncpa [#allocation3], 0
    %11 = vsyncpa [#allocation6], 0
    %12 = vsyncpa [#allocation4], 0
    // Predicated region
    $region2: #{tpu_custom_call.1} parent=1 // pred_check
      _
    $region3: #{tpu_custom_call.1} parent=1 // pred_check_branch
      %14 = sbr.rel (0) target = $region5
    $region4: #{tpu_custom_call.1} parent=1 // pred_region
      %s16 = ssub.s32 128, 128
      %17 = vsyncadd [#allocation3], %s16
      %s18 = sshll.u32 [#allocation2], 4
      %s19 = int_to_ptr.vmem [resolvable:$true] %s18
      %24 = dma.hbm_to_vmem [thread:$0]  %s0, 128, %s19, [#allocation3], 64, 64, 4
    $region5: #{tpu_custom_call.1} parent=1 // pred_fallthru
      _
    // Predicated region
    $region6: #{tpu_custom_call.1} parent=1 // pred_check
      _
    $region7: #{tpu_custom_call.1} parent=1 // pred_check_branch
      %26 = sbr.rel (0) target = $region9
    $region8: #{tpu_custom_call.1} parent=1 // pred_region
      %s28 = ssub.s32 1024, 1024
      %29 = vsyncadd [#allocation6], %s28
      %s30 = sshll.u32 [#allocation5], 4
      %s31 = int_to_ptr.vmem [resolvable:$true] %s30
      %36 = dma.hbm_to_vmem [thread:$0]  %s1, 1024, %s31, [#allocation6], 64, 64, 4
    $region9: #{tpu_custom_call.1} parent=1 // pred_fallthru
      _
    // Predicated region
    $region10: #{tpu_custom_call.1} parent=1 // pred_check
      _
    $region11: #{tpu_custom_call.1} parent=1 // pred_check_branch
      %38 = sbr.rel (0) target = $region13
    $region12: #{tpu_custom_call.1} parent=1 // pred_region
      _
    $region13: #{tpu_custom_call.1} parent=1 // pred_fallthru
      _
    // Predicated region
    $region14: #{tpu_custom_call.1} parent=1 // pred_check
      _
    $region15: #{tpu_custom_call.1} parent=1 // pred_check_branch
      %40 = sbr.rel (0) target = $region17
    $region16: #{tpu_custom_call.1} parent=1 // pred_region
      %s42 = ssub.s32 1024, 1024
      %43 = vsyncadd [#allocation6], %s42
      %s44 = sshll.u32 [#allocation7], 4
      %s45 = int_to_ptr.vmem [resolvable:$true] %s44
      %50 = dma.hbm_to_vmem [thread:$0]  %s3, 1024, %s45, [#allocation6], 64, 64, 4
    $region17: #{tpu_custom_call.1} parent=1 // pred_fallthru
      _
    // Predicated region
    $region18: #{tpu_custom_call.1} parent=1 // pred_check
      _
    $region19: #{tpu_custom_call.1} parent=1 // pred_check_branch
      %52 = sbr.rel (0) target = $region21
    $region20: #{tpu_custom_call.1} parent=1 // pred_region
      _
    $region21: #{tpu_custom_call.1} parent=1 // pred_fallthru
      _
    // Predicated region
    $region22: #{tpu_custom_call.1} parent=1 // pred_check
      _
    $region23: #{tpu_custom_call.1} parent=1 // pred_check_branch
      %54 = sbr.rel (0) target = $region25
    $region24: #{tpu_custom_call.1} parent=1 // pred_region
      %55 = dma.done [#allocation3], 128
    $region25: #{tpu_custom_call.1} parent=1 // pred_fallthru
      _
    // Predicated region
    $region26: #{tpu_custom_call.1} parent=1 // pred_check
      _
    $region27: #{tpu_custom_call.1} parent=1 // pred_check_branch
      %57 = sbr.rel (0) target = $region29
    $region28: #{tpu_custom_call.1} parent=1 // pred_region
      %58 = dma.done [#allocation6], 1024
    $region29: #{tpu_custom_call.1} parent=1 // pred_fallthru
      _
    // Predicated region
    $region30: #{tpu_custom_call.1} parent=1 // pred_check
      _
    $region31: #{tpu_custom_call.1} parent=1 // pred_check_branch
      %60 = sbr.rel (0) target = $region33
    $region32: #{tpu_custom_call.1} parent=1 // pred_region
      %61 = dma.done [#allocation6], 1024
    $region33: #{tpu_custom_call.1} parent=1 // pred_fallthru
      _
    %v63 = vld [vmem:[#allocation2] sm:$0xf]
    %v64 = vld [vmem:[#allocation2 + $0x4] sm:$0xf]
    %v65 = vld [vmem:[#allocation5] sm:$0xf]
    %v66 = vld [vmem:[#allocation5 + $0x4] sm:$0xf]
    %v67 = vld [vmem:[#allocation5 + $0x8] sm:$0xf]
    %v68 = vld [vmem:[#allocation5 + $0xc] sm:$0xf]
    %v69 = vld [vmem:[#allocation5 + $0x10] sm:$0xf]
    %v70 = vld [vmem:[#allocation5 + $0x14] sm:$0xf]
    %v71 = vld [vmem:[#allocation5 + $0x18] sm:$0xf]
    %v72 = vld [vmem:[#allocation5 + $0x1c] sm:$0xf]
    %v73 = vld [vmem:[#allocation5 + $0x20] sm:$0xf]
    %v74 = vld [vmem:[#allocation5 + $0x24] sm:$0xf]
    %v75 = vld [vmem:[#allocation5 + $0x28] sm:$0xf]
    %v76 = vld [vmem:[#allocation5 + $0x2c] sm:$0xf]
    %v77 = vld [vmem:[#allocation5 + $0x30] sm:$0xf]
    %v78 = vld [vmem:[#allocation5 + $0x34] sm:$0xf]
    %v79 = vld [vmem:[#allocation5 + $0x38] sm:$0xf]
    %v80 = vld [vmem:[#allocation5 + $0x3c] sm:$0xf]
    %v81 = vld [vmem:[%s2] sm:$0x1]
    %v83 = vlaneseq
    %v84 = vshrl.u32 %v83, 7
    %v85 = vsub.s32 0, %v84
    %v86 = vrot.slane %v81, %v85
    %v90 = vunpack.c.l.b16 %v63
    %v91 = vunpack.c.l.b16 %v64
    %v92 = vpack.c.b16 %v91, %v90
    %v110 = vunpack.c.l.b16 %v65
    %v111 = vunpack.c.l.b16 %v66
    %v112 = vunpack.c.l.b16 %v67
    %v113 = vunpack.c.l.b16 %v68
    %v114 = vunpack.c.l.b16 %v69
    %v115 = vunpack.c.l.b16 %v70
    %v116 = vunpack.c.l.b16 %v71
    %v117 = vunpack.c.l.b16 %v72
    %v118 = vunpack.c.l.b16 %v73
    %v119 = vunpack.c.l.b16 %v74
    %v120 = vunpack.c.l.b16 %v75
    %v121 = vunpack.c.l.b16 %v76
    %v122 = vunpack.c.l.b16 %v77
    %v123 = vunpack.c.l.b16 %v78
    %v124 = vunpack.c.l.b16 %v79
    %v125 = vunpack.c.l.b16 %v80
    %v126 = vpack.c.b16 %v111, %v110
    %v127 = vpack.c.b16 %v113, %v112
    %v128 = vpack.c.b16 %v115, %v114
    %v129 = vpack.c.b16 %v117, %v116
    %v130 = vpack.c.b16 %v119, %v118
    %v131 = vpack.c.b16 %v121, %v120
    %v132 = vpack.c.b16 %v123, %v122
    %v133 = vpack.c.b16 %v125, %v124
    %142 = vmatprep.subr.bf16.mxu0 0
    %143 = vmatpush1.bf16.msra.mxu0 %v126
    %144 = vmatprep.subr.bf16.mxu0 0
    %145 = vmatpush1.bf16.msra.mxu0 %v127
    %146 = vmatprep.subr.bf16.mxu0 0
    %147 = vmatpush1.bf16.msra.mxu0 %v128
    %148 = vmatprep.subr.bf16.mxu0 0
    %149 = vmatpush1.bf16.msra.mxu0 %v129
    %150 = vmatprep.subr.bf16.mxu0 0
    %151 = vmatpush1.bf16.msra.mxu0 %v130
    %152 = vmatprep.subr.bf16.mxu0 0
    %153 = vmatpush1.bf16.msra.mxu0 %v131
    %154 = vmatprep.subr.bf16.mxu0 0
    %155 = vmatpush1.bf16.msra.mxu0 %v132
    %156 = vmatprep.subr.bf16.mxu0 0
    %157 = vmatpush1.bf16.msra.mxu0 %v133
    %158 = vmatprep.subr.bf16.mxu0 0
    %159 = vmatpush1.bf16.msra.mxu0 0
    %160 = vmatprep.subr.bf16.mxu0 0
    %161 = vmatpush1.bf16.msra.mxu0 0
    %162 = vmatprep.subr.bf16.mxu0 0
    %163 = vmatpush1.bf16.msra.mxu0 0
    %164 = vmatprep.subr.bf16.mxu0 0
    %165 = vmatpush1.bf16.msra.mxu0 0
    %166 = vmatprep.subr.bf16.mxu0 0
    %167 = vmatpush1.bf16.msra.mxu0 0
    %168 = vmatprep.subr.bf16.mxu0 0
    %169 = vmatpush1.bf16.msra.mxu0 0
    %170 = vmatprep.subr.bf16.mxu0 0
    %171 = vmatpush1.bf16.msra.mxu0 0
    %172 = vmatprep.subr.bf16.mxu0 0
    %173 = vmatpush1.bf16.msra.mxu0 0
    %174 = vmatprep.mubr.bf16.mxu0 0
    %175 = vmatmul.mubr.bf16.gmra.mrb[0].mxu0 %v92
    %v176 = vpop.f32.mrb[0].mxu0
    %v177 = vadd.f32 %v86, %v176
    %v178 = vpop.f32.mrb[0].mxu0
    %v179 = vpop.f32.mrb[0].mxu0
    %v180 = vadd.f32 %v86, %v179
    %v181 = vpop.f32.mrb[0].mxu0
    %182 = vdwg.mxu0
    %v183 = vmul.f32 %v177, %v177
    %v184 = vmul.f32 %v180, %v180
    %v185 = vmul.f32 %v177, %v183
    %v186 = vmul.f32 %v180, %v184
    %v187 = vmul.f32 %v185, 0.044715
    %v188 = vmul.f32 %v186, 0.044715
    %v189 = vadd.f32 %v177, %v187
    %v190 = vadd.f32 %v180, %v188
    %v191 = vmul.f32 %v189, 0.7978846
    %v192 = vmul.f32 %v190, 0.7978846
    %v193 = vtanh.pop %v191
    %v194 = vtanh.pop %v192
    %v195 = vadd.f32 %v193, 1.0
    %v196 = vadd.f32 %v194, 1.0
    %v197 = vmul.f32 %v195, 0.5
    %v198 = vmul.f32 %v196, 0.5
    %v199 = vmul.f32 %v177, %v197
    %v200 = vmul.f32 %v180, %v198
    %v201 = vpack.c.bf16 %v200, %v199
    %v202 = vld [vmem:[#allocation7] sm:$0xf]
    %v203 = vld [vmem:[#allocation7 + $0x4] sm:$0xf]
    %v204 = vld [vmem:[#allocation7 + $0x8] sm:$0xf]
    %v205 = vld [vmem:[#allocation7 + $0xc] sm:$0xf]
    %v206 = vld [vmem:[#allocation7 + $0x10] sm:$0xf]
    %v207 = vld [vmem:[#allocation7 + $0x14] sm:$0xf]
    %v208 = vld [vmem:[#allocation7 + $0x18] sm:$0xf]
    %v209 = vld [vmem:[#allocation7 + $0x1c] sm:$0xf]
    %v210 = vld [vmem:[#allocation7 + $0x20] sm:$0xf]
    %v211 = vld [vmem:[#allocation7 + $0x24] sm:$0xf]
    %v212 = vld [vmem:[#allocation7 + $0x28] sm:$0xf]
    %v213 = vld [vmem:[#allocation7 + $0x2c] sm:$0xf]
    %v214 = vld [vmem:[#allocation7 + $0x30] sm:$0xf]
    %v215 = vld [vmem:[#allocation7 + $0x34] sm:$0xf]
    %v216 = vld [vmem:[#allocation7 + $0x38] sm:$0xf]
    %v217 = vld [vmem:[#allocation7 + $0x3c] sm:$0xf]
    %v218 = vld [vmem:[%s4] sm:$0x1]
    %v220 = vlaneseq
    %v221 = vshrl.u32 %v220, 7
    %v222 = vsub.s32 0, %v221
    %v223 = vrot.slane %v218, %v222
    %v241 = vunpack.c.l.b16 %v202
    %v242 = vunpack.c.l.b16 %v203
    %v243 = vunpack.c.l.b16 %v204
    %v244 = vunpack.c.l.b16 %v205
    %v245 = vunpack.c.l.b16 %v206
    %v246 = vunpack.c.l.b16 %v207
    %v247 = vunpack.c.l.b16 %v208
    %v248 = vunpack.c.l.b16 %v209
    %v249 = vunpack.c.l.b16 %v210
    %v250 = vunpack.c.l.b16 %v211
    %v251 = vunpack.c.l.b16 %v212
    %v252 = vunpack.c.l.b16 %v213
    %v253 = vunpack.c.l.b16 %v214
    %v254 = vunpack.c.l.b16 %v215
    %v255 = vunpack.c.l.b16 %v216
    %v256 = vunpack.c.l.b16 %v217
    %v257 = vpack.c.b16 %v242, %v241
    %v258 = vpack.c.b16 %v244, %v243
    %v259 = vpack.c.b16 %v246, %v245
    %v260 = vpack.c.b16 %v248, %v247
    %v261 = vpack.c.b16 %v250, %v249
    %v262 = vpack.c.b16 %v252, %v251
    %v263 = vpack.c.b16 %v254, %v253
    %v264 = vpack.c.b16 %v256, %v255
    %273 = vmatprep.subr.bf16.mxu0 0
    %274 = vmatpush1.bf16.msra.mxu0 %v257
    %275 = vmatprep.subr.bf16.mxu0 0
    %276 = vmatpush1.bf16.msra.mxu0 %v258
    %277 = vmatprep.subr.bf16.mxu0 0
    %278 = vmatpush1.bf16.msra.mxu0 %v259
    %279 = vmatprep.subr.bf16.mxu0 0
    %280 = vmatpush1.bf16.msra.mxu0 %v260
    %281 = vmatprep.subr.bf16.mxu0 0
    %282 = vmatpush1.bf16.msra.mxu0 %v261
    %283 = vmatprep.subr.bf16.mxu0 0
    %284 = vmatpush1.bf16.msra.mxu0 %v262
    %285 = vmatprep.subr.bf16.mxu0 0
    %286 = vmatpush1.bf16.msra.mxu0 %v263
    %287 = vmatprep.subr.bf16.mxu0 0
    %288 = vmatpush1.bf16.msra.mxu0 %v264
    %289 = vmatprep.subr.bf16.mxu0 0
    %290 = vmatpush1.bf16.msra.mxu0 0
    %291 = vmatprep.subr.bf16.mxu0 0
    %292 = vmatpush1.bf16.msra.mxu0 0
    %293 = vmatprep.subr.bf16.mxu0 0
    %294 = vmatpush1.bf16.msra.mxu0 0
    %295 = vmatprep.subr.bf16.mxu0 0
    %296 = vmatpush1.bf16.msra.mxu0 0
    %297 = vmatprep.subr.bf16.mxu0 0
    %298 = vmatpush1.bf16.msra.mxu0 0
    %299 = vmatprep.subr.bf16.mxu0 0
    %300 = vmatpush1.bf16.msra.mxu0 0
    %301 = vmatprep.subr.bf16.mxu0 0
    %302 = vmatpush1.bf16.msra.mxu0 0
    %303 = vmatprep.subr.bf16.mxu0 0
    %304 = vmatpush1.bf16.msra.mxu0 0
    %305 = vmatprep.mubr.bf16.mxu0 0
    %306 = vmatmul.mubr.bf16.gmra.mrb[0].mxu0 %v201
    %v307 = vpop.f32.mrb[0].mxu0
    %v308 = vadd.f32 %v223, %v307
    %v309 = vpop.f32.mrb[0].mxu0
    %v310 = vpop.f32.mrb[0].mxu0
    %v311 = vadd.f32 %v223, %v310
    %v312 = vpop.f32.mrb[0].mxu0
    %313 = vdwg.mxu0
    %314 = vst [vmem:[#allocation8] sm:$0xff] %v308
    %315 = vst [vmem:[#allocation8 + $0x8] sm:$0xff] %v311
    // Predicated region
    $region34: #{tpu_custom_call.1} parent=1 // pred_check
      _
    $region35: #{tpu_custom_call.1} parent=1 // pred_check_branch
      %317 = sbr.rel (0) target = $region37
    $region36: #{tpu_custom_call.1} parent=1 // pred_region
      %s319 = ssub.s32 256, 256
      %320 = vsyncadd [#allocation4], %s319
      %s321 = sshll.u32 [#allocation8], 4
      %s322 = int_to_ptr.vmem [resolvable:$true] %s321
      %327 = dma.vmem_to_hbm [thread:$0]  %s322, 256, %s5, [#allocation4], 128, 128, 8
    $region37: #{tpu_custom_call.1} parent=1 // pred_fallthru
      _
    // Predicated region
    $region38: #{tpu_custom_call.1} parent=1 // pred_check
      _
    $region39: #{tpu_custom_call.1} parent=1 // pred_check_branch
      %329 = sbr.rel (0) target = $region41
    $region40: #{tpu_custom_call.1} parent=1 // pred_region
      %330 = dma.done [#allocation4], 256
    $region41: #{tpu_custom_call.1} parent=1 // pred_fallthru
      _
    %331 = vsyncpa [#allocation3], 1
    %332 = vsyncpa [#allocation6], 1
    %333 = vsyncpa [#allocation4], 1

</llo_original>
